<compile_context>
chip_gen: v6e
topology: v6e:2x2x1
jax: 0.10.0
libtpu: 0.0.40
codegen_flags: <defaults>
</compile_context>

<pallas_src>
import functools

import jax
import jax.numpy as jnp
from jax import lax
from jax.experimental import pallas as pl
from jax.experimental.pallas import tpu as pltpu


# ----------------------------------------------------------------------------
# exact-GELU helper: erf via Abramowitz & Stegun 7.1.26 (max abs err ~1.5e-7).
# Matches torch.nn.GELU() (erf form) to well below bf16 precision.
# ----------------------------------------------------------------------------
def _erf(z):
    a1, a2, a3, a4, a5 = (0.254829592, -0.284496736, 1.421413741,
                          -1.453152027, 1.061405429)
    p = 0.3275911
    sign = jnp.where(z >= 0.0, 1.0, -1.0)
    az = jnp.abs(z)
    # EUP approximate reciprocal: free slot next to the MXU/VALU work.
    t = pl.reciprocal(1.0 + p * az, approx=True)
    poly = t * (a1 + t * (a2 + t * (a3 + t * (a4 + t * a5))))
    return sign * (1.0 - poly * jnp.exp(-az * az))


def _gelu_exact(x):
    return 0.5 * x * (1.0 + _erf(x * 0.7071067811865476))


# ----------------------------------------------------------------------------
# Fused MLP kernel.
#   grid = (M/tm, H/th)
#   x_ref  : (tm, K)    bf16   (resident across the h axis)
#   w1_ref : (th, K)    bf16   torch layout (hidden, in)
#   b1_ref : (1, th)    f32
#   w2_ref : (Nout, th) bf16   torch layout (out, hidden)
#   b2_ref : (1, Nout)  f32
#   o_ref  : (tm, Nout) x.dtype
#   acc_ref: (tm, Nout) f32 VMEM scratch (fc2 accumulator, bias folded in init)
# ----------------------------------------------------------------------------
def _mlp_kernel(x_ref, w1_ref, b1_ref, w2_ref, b2_ref, o_ref, acc_ref):
    h = pl.program_id(1)

    @pl.when(h == 0)
    def _init():
        # Fold the fc2 bias into the accumulator init (saves a finalize add).
        acc_ref[...] = jnp.broadcast_to(b2_ref[...], acc_ref.shape)

    # fc1 block: (tm, K) . (th, K)^T -> (tm, th).  rhs contracts on dim 1
    # (torch-layout weight, MXU handles trans_b natively -- no transpose copy).
    pre = lax.dot_general(
        x_ref[...], w1_ref[...],
        dimension_numbers=(((1,), (1,)), ((), ())),
        preferred_element_type=jnp.float32)
    act = _gelu_exact(pre + b1_ref[...])           # bias + exact GELU in f32

    # fc2 accumulate: (tm, th) . (Nout, th)^T -> (tm, Nout), f32 accumulation.
    acc_ref[...] += lax.dot_general(
        act.astype(w2_ref.dtype), w2_ref[...],
        dimension_numbers=(((1,), (1,)), ((), ())),
        preferred_element_type=jnp.float32)

    @pl.when(h == pl.num_programs(1) - 1)
    def _finalize():
        o_ref[...] = acc_ref[...].astype(o_ref.dtype)


# ----------------------------------------------------------------------------
# Tile derivation under an explicit VMEM budget.
# ----------------------------------------------------------------------------
def _round_up(v, m):
    return ((v + m - 1) // m) * m


def _pick_div_tile(dim, target, align):
    """Largest multiple of `align` that divides `dim` and is <= target;
    falls back to the full dim (always a legal full-extent block)."""
    if dim % align != 0:
        return dim
    t = min(target, dim)
    t -= t % align
    while t >= align:
        if dim % t == 0:
            return t
        t -= align
    return dim


def _fused_working_set_bytes(tm, th, K, Nout, in_bytes, out_bytes):
    dbl = 2  # Pallas double-buffers every BlockSpec-managed operand
    return (dbl * tm * K * in_bytes            # x tile
            + dbl * th * K * in_bytes          # W1 block
            + dbl * Nout * th * in_bytes       # W2 block
            + dbl * (th + Nout) * 4            # biases (f32, tiny)
            + dbl * tm * Nout * out_bytes      # output tile
            + tm * Nout * 4)                   # f32 accumulator scratch


def _derive_tiles(M, K, H, Nout, in_bytes, out_bytes, vmem_budget_bytes,
                  tm_target, th_target):
    # tm is a free choice (we pad M to a multiple of it); multiple of 16 for
    # bf16 sublane packing.
    tm = min(tm_target, _round_up(M, 16))
    tm = max(16, tm - tm % 16)
    # th: largest 128-aligned divisor of H (full H if H is not 128-aligned).
    th = _pick_div_tile(H, th_target, 128)

    def ws(tm_, th_):
        return _fused_working_set_bytes(tm_, th_, K, Nout, in_bytes, out_bytes)

    # Shrink th, then tm, until the double-buffered working set fits.
    while ws(tm, th) > vmem_budget_bytes and th > 128 and H % 128 == 0:
        nxt = _pick_div_tile(H, th - 128, 128)
        if nxt >= th:
            break
        th = nxt
    while ws(tm, th) > vmem_budget_bytes and tm > 16:
        tm = max(16, (tm // 2) - ((tm // 2) % 16))
    return tm, th


def _vmem_limit(ws_bytes):
    # Cover the working set with headroom, stay >= 32 MiB (fine on all gens)
    # and <= 56 MiB (under v7x's 64 MiB physical VMEM).
    return int(min(max(ws_bytes * 13 // 10 + (2 << 20), 32 << 20), 56 << 20))


# ----------------------------------------------------------------------------
# Mlp forward:  drop(fc2(act(drop(fc1(x)))))  with drop p = 0.0 (identity)
# ----------------------------------------------------------------------------
def mlp(x, w1, b1, w2, b2, *, vmem_budget_bytes=48 << 20,
        tm_target=256, th_target=512):
    """x: (..., in_features).  Weights in torch nn.Linear layout (out, in)."""
    orig_shape = x.shape
    orig_dtype = x.dtype
    K = x.shape[-1]
    H, Kw = w1.shape
    Nout, Hw = w2.shape
    assert K == Kw and H == Hw and Nout == K

    x2d = x.reshape(-1, K)
    M = x2d.shape[0]

    in_bytes = 2                                   # bf16 data path
    out_bytes = jnp.dtype(orig_dtype).itemsize
    tm, th = _derive_tiles(M, K, H, Nout, in_bytes, out_bytes,
                           vmem_budget_bytes, tm_target, th_target)

    # Pad M so tm always divides (avoids falling back to one giant tile).
    M_pad = _round_up(M, tm)
    if M_pad != M:
        x2d = jnp.pad(x2d, ((0, M_pad - M), (0, 0)))

    # bf16 at the pallas_call boundary (MXU truncates f32->bf16 at default
    # precision anyway); biases stay f32 and are applied in f32 in-kernel.
    xb = x2d.astype(jnp.bfloat16)
    w1b = w1.astype(jnp.bfloat16)                  # torch layout, no transpose
    w2b = w2.astype(jnp.bfloat16)
    b1r = b1.reshape(1, H).astype(jnp.float32)
    b2r = b2.reshape(1, Nout).astype(jnp.float32)

    grid = (M_pad // tm, H // th)
    ws = _fused_working_set_bytes(tm, th, K, Nout, in_bytes, out_bytes)

    # TODO(synk): for very large in_features the full-K x tile / full-Nout
    # output tile would need an additional K split; not needed at these sizes.
    # TODO(synk): dropout with p > 0 would need pltpu.prng_seed/prng_random_bits;
    # the module default p = 0.0 is the identity, so it is omitted.
    out = pl.pallas_call(
        _mlp_kernel,
        out_shape=jax.ShapeDtypeStruct((M_pad, Nout), orig_dtype),
        grid_spec=pltpu.PrefetchScalarGridSpec(
            num_scalar_prefetch=0,
            grid=grid,
            in_specs=[
                pl.BlockSpec((tm, K), lambda i, h: (i, 0)),     # x (resident over h)
                pl.BlockSpec((th, K), lambda i, h: (h, 0)),     # W1 block
                pl.BlockSpec((1, th), lambda i, h: (0, h)),     # b1 block
                pl.BlockSpec((Nout, th), lambda i, h: (0, h)),  # W2 block
                pl.BlockSpec((1, Nout), lambda i, h: (0, 0)),   # b2
            ],
            out_specs=pl.BlockSpec((tm, Nout), lambda i, h: (i, 0)),
            scratch_shapes=[pltpu.VMEM((tm, Nout), jnp.float32)],
        ),
        compiler_params=pltpu.CompilerParams(
            dimension_semantics=("parallel", "arbitrary"),
            vmem_limit_bytes=_vmem_limit(ws)),
    )(xb, w1b, b1r, w2b, b2r)

    if M_pad != M:
        out = out[:M]
    return out.reshape(orig_shape)


# ----------------------------------------------------------------------------
# Pure-JAX reference with matching bf16 input/activation rounding
# (torch semantics: nn.GELU() is exact erf, dropout p=0 is identity).
# ----------------------------------------------------------------------------
def _reference(x, w1, b1, w2, b2):
    f32 = jnp.float32
    xb = x.astype(jnp.bfloat16).astype(f32)
    w1b = w1.astype(jnp.bfloat16).astype(f32)
    w2b = w2.astype(jnp.bfloat16).astype(f32)
    h = jax.nn.gelu(xb @ w1b.T + b1, approximate=False)
    h = h.astype(jnp.bfloat16).astype(f32)
    return (h @ w2b.T + b2).astype(x.dtype)


if __name__ == "__main__":
    B, N, in_features, hidden_features = 2, 64, 256, 512

    key = jax.random.PRNGKey(0)
    kx, kw1, kb1, kw2, kb2 = jax.random.split(key, 5)

    x = jax.random.normal(kx, (B, N, in_features), dtype=jnp.float32)
    # torch nn.Linear layout: weight (out_features, in_features), bias (out,)
    w1 = jax.random.normal(kw1, (hidden_features, in_features), jnp.float32) * 0.05
    b1 = jax.random.normal(kb1, (hidden_features,), jnp.float32) * 0.05
    w2 = jax.random.normal(kw2, (in_features, hidden_features), jnp.float32) * 0.05
    b2 = jax.random.normal(kb2, (in_features,), jnp.float32) * 0.05

    # Small tile targets so the (M parallel, H reduction) pipeline is actually
    # exercised with a multi-block grid at these small demo shapes.
    out = mlp(x, w1, b1, w2, b2, tm_target=64, th_target=128)
    out = jax.block_until_ready(out)

    ref = _reference(x, w1, b1, w2, b2)
    assert out.shape == x.shape
    err = float(jnp.max(jnp.abs(out - ref)))
    assert jnp.allclose(out, ref, atol=2e-2, rtol=2e-2), err

    print("KERNEL_OK")
</pallas_src>

<mosaic_0001>
module attributes {stable_mosaic.version = 11 : i64} {
  func.func @_mlp_kernel(%arg0: i32, %arg1: i32, %arg2: memref<64x256xbf16, #tpu.memory_space<vmem>>, %arg3: memref<128x256xbf16, #tpu.memory_space<vmem>>, %arg4: memref<1x128xf32, #tpu.memory_space<vmem>>, %arg5: memref<256x128xbf16, #tpu.memory_space<vmem>>, %arg6: memref<1x256xf32, #tpu.memory_space<vmem>>, %arg7: memref<64x256xf32, #tpu.memory_space<vmem>>, %arg8: memref<64x256xf32, #tpu.memory_space<vmem>>) attributes {dimension_semantics = [#tpu.dimension_semantics<parallel>, #tpu.dimension_semantics<arbitrary>], iteration_bounds = array<i64: 2, 4>, scalar_prefetch = 0 : i64, scratch_operands = 1 : i64, tpu.core_type = #tpu.core_type<tc>, window_params = [{transform_indices = @transform_0, window_bounds = array<i64: 64, 256>}, {transform_indices = @transform_1, window_bounds = array<i64: 128, 256>}, {transform_indices = @transform_2, window_bounds = array<i64: 1, 128>}, {transform_indices = @transform_3, window_bounds = array<i64: 256, 128>}, {pipeline_mode = #tpu.pipeline_mode<synchronous>, transform_indices = @transform_4, window_bounds = array<i64: 1, 256>}, {transform_indices = @transform_5, window_bounds = array<i64: 64, 256>}]} {
    %c0_i32 = arith.constant 0 : i32
    %0 = arith.cmpi eq, %arg1, %c0_i32 : i32
    %1 = arith.extui %0 : i1 to i32
    %c0_i32_0 = arith.constant 0 : i32
    %2 = arith.cmpi ne, %1, %c0_i32_0 : i32
    scf.if %2 {
      %c0_29 = arith.constant 0 : index
      %c0_30 = arith.constant 0 : index
      %58 = vector.load %arg6[%c0_29, %c0_30] : memref<1x256xf32, #tpu.memory_space<vmem>>, vector<1x256xf32>
      %59 = vector.shape_cast %58 : vector<1x256xf32> to vector<1x256xf32>
      %60 = vector.broadcast %59 : vector<1x256xf32> to vector<64x256xf32>
      %c0_31 = arith.constant 0 : index
      %c0_32 = arith.constant 0 : index
      %61 = vector.load %arg8[%c0_31, %c0_32] : memref<64x256xf32, #tpu.memory_space<vmem>>, vector<64x256xf32>
      tpu.vector_store %arg8[%c0_31, %c0_32], %60 {strides = array<i32>} : memref<64x256xf32, #tpu.memory_space<vmem>>, vector<64x256xf32>,
    } else {
    }
    %c0 = arith.constant 0 : index
    %c0_1 = arith.constant 0 : index
    %3 = vector.load %arg2[%c0, %c0_1] : memref<64x256xbf16, #tpu.memory_space<vmem>>, vector<64x256xbf16>
    %c0_2 = arith.constant 0 : index
    %c0_3 = arith.constant 0 : index
    %4 = vector.load %arg3[%c0_2, %c0_3] : memref<128x256xbf16, #tpu.memory_space<vmem>>, vector<128x256xbf16>
    %cst = arith.constant dense<0.000000e+00> : vector<64x128xf32>
    %5 = tpu.matmul %3, %4, %cst {dimension_numbers = #tpu.dot_dimension_numbers<[1], [1], [0], [0], [0, 0, 1, 0], [], []>} : vector<64x256xbf16>, vector<128x256xbf16>, vector<64x128xf32> -> vector<64x128xf32>
    %c0_4 = arith.constant 0 : index
    %c0_5 = arith.constant 0 : index
    %6 = vector.load %arg4[%c0_4, %c0_5] : memref<1x128xf32, #tpu.memory_space<vmem>>, vector<1x128xf32>
    %7 = vector.broadcast %6 : vector<1x128xf32> to vector<64x128xf32>
    %8 = arith.addf %5, %7 : vector<64x128xf32>
    %cst_6 = arith.constant 5.000000e-01 : f32
    %9 = vector.broadcast %cst_6 : f32 to vector<64x128xf32>
    %10 = arith.mulf %9, %8 : vector<64x128xf32>
    %cst_7 = arith.constant 0.707106769 : f32
    %11 = vector.broadcast %cst_7 : f32 to vector<64x128xf32>
    %12 = arith.mulf %8, %11 : vector<64x128xf32>
    %cst_8 = arith.constant 0.000000e+00 : f32
    %13 = vector.broadcast %cst_8 : f32 to vector<64x128xf32>
    %14 = arith.cmpf oge, %12, %13 : vector<64x128xf32>
    %cst_9 = arith.constant 1.000000e+00 : f32
    %cst_10 = arith.constant -1.000000e+00 : f32
    %15 = vector.broadcast %cst_9 : f32 to vector<64x128xf32>
    %16 = vector.broadcast %cst_10 : f32 to vector<64x128xf32>
    %17 = arith.select %14, %15, %16 : vector<64x128xi1>, vector<64x128xf32>
    %18 = math.absf %12 : vector<64x128xf32>
    %cst_11 = arith.constant 0.327591091 : f32
    %19 = vector.broadcast %cst_11 : f32 to vector<64x128xf32>
    %20 = arith.mulf %19, %18 : vector<64x128xf32>
    %cst_12 = arith.constant 1.000000e+00 : f32
    %21 = vector.broadcast %cst_12 : f32 to vector<64x128xf32>
    %22 = arith.addf %21, %20 : vector<64x128xf32>
    %23 = tpu.reciprocal %22 {approx = true} : vector<64x128xf32> -> vector<64x128xf32>
    %cst_13 = arith.constant 1.06140542 : f32
    %24 = vector.broadcast %cst_13 : f32 to vector<64x128xf32>
    %25 = arith.mulf %23, %24 : vector<64x128xf32>
    %cst_14 = arith.constant -1.45315206 : f32
    %26 = vector.broadcast %cst_14 : f32 to vector<64x128xf32>
    %27 = arith.addf %26, %25 : vector<64x128xf32>
    %28 = arith.mulf %23, %27 : vector<64x128xf32>
    %cst_15 = arith.constant 1.42141378 : f32
    %29 = vector.broadcast %cst_15 : f32 to vector<64x128xf32>
    %30 = arith.addf %29, %28 : vector<64x128xf32>
    %31 = arith.mulf %23, %30 : vector<64x128xf32>
    %cst_16 = arith.constant -0.284496725 : f32
    %32 = vector.broadcast %cst_16 : f32 to vector<64x128xf32>
    %33 = arith.addf %32, %31 : vector<64x128xf32>
    %34 = arith.mulf %23, %33 : vector<64x128xf32>
    %cst_17 = arith.constant 0.254829586 : f32
    %35 = vector.broadcast %cst_17 : f32 to vector<64x128xf32>
    %36 = arith.addf %35, %34 : vector<64x128xf32>
    %37 = arith.mulf %23, %36 : vector<64x128xf32>
    %cst_18 = arith.constant 0.000000e+00 : f32
    %38 = vector.broadcast %cst_18 : f32 to vector<64x128xf32>
    %39 = arith.subf %38, %18 : vector<64x128xf32>
    %40 = arith.mulf %39, %18 : vector<64x128xf32>
    %41 = math.exp %40 : vector<64x128xf32>
    %42 = arith.mulf %37, %41 : vector<64x128xf32>
    %cst_19 = arith.constant 1.000000e+00 : f32
    %43 = vector.broadcast %cst_19 : f32 to vector<64x128xf32>
    %44 = arith.subf %43, %42 : vector<64x128xf32>
    %45 = arith.mulf %17, %44 : vector<64x128xf32>
    %cst_20 = arith.constant 1.000000e+00 : f32
    %46 = vector.broadcast %cst_20 : f32 to vector<64x128xf32>
    %47 = arith.addf %46, %45 : vector<64x128xf32>
    %48 = arith.mulf %10, %47 : vector<64x128xf32>
    %c0_21 = arith.constant 0 : index
    %c0_22 = arith.constant 0 : index
    %49 = vector.load %arg8[%c0_21, %c0_22] : memref<64x256xf32, #tpu.memory_space<vmem>>, vector<64x256xf32>
    %50 = arith.truncf %48 : vector<64x128xf32> to vector<64x128xbf16>
    %c0_23 = arith.constant 0 : index
    %c0_24 = arith.constant 0 : index
    %51 = vector.load %arg5[%c0_23, %c0_24] : memref<256x128xbf16, #tpu.memory_space<vmem>>, vector<256x128xbf16>
    %cst_25 = arith.constant dense<0.000000e+00> : vector<64x256xf32>
    %52 = tpu.matmul %50, %51, %cst_25 {dimension_numbers = #tpu.dot_dimension_numbers<[1], [1], [0], [0], [0, 0, 1, 0], [], []>} : vector<64x128xbf16>, vector<256x128xbf16>, vector<64x256xf32> -> vector<64x256xf32>
    %53 = arith.addf %49, %52 : vector<64x256xf32>
    %c0_26 = arith.constant 0 : index
    %c0_27 = arith.constant 0 : index
    %54 = vector.load %arg8[%c0_26, %c0_27] : memref<64x256xf32, #tpu.memory_space<vmem>>, vector<64x256xf32>
    tpu.vector_store %arg8[%c0_26, %c0_27], %53 {strides = array<i32>} : memref<64x256xf32, #tpu.memory_space<vmem>>, vector<64x256xf32>,
    %c3_i32 = arith.constant 3 : i32
    %55 = arith.cmpi eq, %arg1, %c3_i32 : i32
    %56 = arith.extui %55 : i1 to i32
    %c0_i32_28 = arith.constant 0 : i32
    %57 = arith.cmpi ne, %56, %c0_i32_28 : i32
    scf.if %57 {
      %c0_29 = arith.constant 0 : index
      %c0_30 = arith.constant 0 : index
      %58 = vector.load %arg8[%c0_29, %c0_30] : memref<64x256xf32, #tpu.memory_space<vmem>>, vector<64x256xf32>
      %c0_31 = arith.constant 0 : index
      %c0_32 = arith.constant 0 : index
      %59 = vector.load %arg7[%c0_31, %c0_32] : memref<64x256xf32, #tpu.memory_space<vmem>>, vector<64x256xf32>
      tpu.vector_store %arg7[%c0_31, %c0_32], %58 {strides = array<i32>} : memref<64x256xf32, #tpu.memory_space<vmem>>, vector<64x256xf32>,
    } else {
    }
    return
  }
  func.func @transform_0(%arg0: i32, %arg1: i32) -> (i32, i32) {
    %c0_i32 = arith.constant 0 : i32
    %c0_i32_0 = arith.constant 0 : i32
    return %arg0, %c0_i32 : i32, i32
  }
  func.func @transform_1(%arg0: i32, %arg1: i32) -> (i32, i32) {
    %c0_i32 = arith.constant 0 : i32
    %c0_i32_0 = arith.constant 0 : i32
    return %arg1, %c0_i32 : i32, i32
  }
  func.func @transform_2(%arg0: i32, %arg1: i32) -> (i32, i32) {
    %c0_i32 = arith.constant 0 : i32
    %c0_i32_0 = arith.constant 0 : i32
    return %c0_i32, %arg1 : i32, i32
  }
  func.func @transform_3(%arg0: i32, %arg1: i32) -> (i32, i32) {
    %c0_i32 = arith.constant 0 : i32
    %c0_i32_0 = arith.constant 0 : i32
    return %c0_i32, %arg1 : i32, i32
  }
  func.func @transform_4(%arg0: i32, %arg1: i32) -> (i32, i32) {
    %c0_i32 = arith.constant 0 : i32
    %c0_i32_0 = arith.constant 0 : i32
    %c0_i32_1 = arith.constant 0 : i32
    return %c0_i32, %c0_i32_0 : i32, i32
  }
  func.func @transform_5(%arg0: i32, %arg1: i32) -> (i32, i32) {
    %c0_i32 = arith.constant 0 : i32
    %c0_i32_0 = arith.constant 0 : i32
    return %arg0, %c0_i32 : i32, i32
  }
}

</mosaic_0001>

<llo_original>
// kernel: tpu_custom_call.1
$region0: #{tpu_custom_call.1}
  #allocation0 [shape = 'u32[]', space=smem, size = 0x4, offset = 0x4, fixed_abs, tag = 'smem constant byte address 0x4 - core index']
  #allocation1 [shape = 'u32[144,128]{1,0:T(1,128)}', space=vmem, size = 0x12000, scoped, tag = 'internal scratch']
  #allocation2 [shape = 'f32[64,256]{1,0:T(8,128)}', space=vmem, size = 0x10000, scoped, tag = 'scratch operand']
  %s0 = inlined_call_operand.hbm [shape: bf16[128,256], index: 0, kind: input, shape index: {}]
  %s1 = inlined_call_operand.hbm [shape: bf16[512,256], index: 1, kind: input, shape index: {}]
  %s2 = inlined_call_operand.hbm [shape: f32[1,512], index: 2, kind: input, shape index: {}]
  %s3 = inlined_call_operand.hbm [shape: bf16[256,512], index: 3, kind: input, shape index: {}]
  %s4 = inlined_call_operand.vmem [shape: f32[1,256], index: 4, kind: input, shape index: {}]
  %s5 = inlined_call_operand.hbm [shape: f32[128,256], index: 5, kind: output, shape index: {}]
  %s6 = sld [smem:[#allocation0]]
  $region77: #{tpu_custom_call.1} parent=0
    _
  %s8 = ssub.s32 1, %s6
  %s9 = scalar_select 0, %s8, %s6
  $region1: #{tpu_custom_call.1} parent=0
    #allocation3 [shape = 'u8[65536]{0}', space=vmem, size = 0x10000, scoped, tag = 'input window, operand 0']
    #allocation4 [shape = 's32[2]{0}', space=sflag, size = 0x8, scoped, tag = 'scoped memory for tpu_custom_call.1']
    #allocation5 [shape = 's32[2]{0}', space=sflag, size = 0x8, scoped, tag = 'scoped memory for tpu_custom_call.1']
    #allocation6 [shape = 'u8[131072]{0}', space=vmem, size = 0x20000, scoped, tag = 'input window, operand 1']
    #allocation7 [shape = 's32[2]{0}', space=sflag, size = 0x8, scoped, tag = 'scoped memory for tpu_custom_call.1']
    #allocation8 [shape = 'u8[1024]{0}', space=vmem, size = 0x400, scoped, tag = 'input window, operand 2']
    #allocation9 [shape = 'u8[131072]{0}', space=vmem, size = 0x20000, scoped, tag = 'input window, operand 3']
    #allocation10 [shape = 's32[2]{0}', space=sflag, size = 0x8, scoped, tag = 'scoped memory for tpu_custom_call.1']
    #allocation11 [shape = 'u8[131072]{0}', space=vmem, size = 0x20000, scoped, tag = 'output window, operand 0']
    %10 = vsyncpa [#allocation4], 0
    %s11 = scalar_lea.sflag [#allocation4], 1
    %12 = vsyncpa %s11, 0
    %13 = vsyncpa [#allocation7], 0
    %s14 = scalar_lea.sflag [#allocation7], 1
    %15 = vsyncpa %s14, 0
    %16 = vsyncpa [#allocation10], 0
    %s17 = scalar_lea.sflag [#allocation10], 1
    %18 = vsyncpa %s17, 0
    %19 = vsyncpa [#allocation5], 0
    %s20 = scalar_lea.sflag [#allocation5], 1
    %21 = vsyncpa %s20, 0
    loop: start=0, step=1, limit=10
    $region2: #{tpu_custom_call.1} parent=1 // loop_pre_header
      _
    $region3: #{tpu_custom_call.1} parent=1 // loop_header
      %s23 = sphi 0, %s27
      %p24 = scmp.ge.s32.totalorder %s23, 10
      %s30 = sphi 0, %s42
      %s31 = sphi 0, %s38
      %s32 = sphi 0, %s30
      %s33 = sphi 0, %s31
      %s34 = sphi 0, %s32
      %s35 = sphi 0, %s33
      %s45 = sphi 0, %s47
      %s48 = sphi 0, %s45
      %s49 = sphi 0, %s48
      %s65 = sphi 0, %s49
      %s71 = sphi 0, %s73
      %s74 = sphi 0, %s71
      %s75 = sphi 0, %s74
      %s91 = sphi 0, %s75
      %s97 = sphi 0, %s99
      %s100 = sphi 0, %s97
      %s101 = sphi 0, %s100
      %s117 = sphi 0, %s101
      %s123 = sphi 0, %s125
      %s126 = sphi 0, %s123
      %s127 = sphi 0, %s126
      %s143 = sphi 0, %s127
      %s147 = sphi 0, %s147
      %s149 = sphi 0, %s147
      %s150 = sphi 0, %s149
      %s164 = sphi 0, %s150
      %s170 = sphi 0, %s172
      %s173 = sphi 0, %s170
      %s174 = sphi 0, %s173
      %s190 = sphi 0, %s174
    $region4: #{tpu_custom_call.1} parent=1 // loop_header_branch
      %26 = sbr.rel (%p24) target = $region8
    $region5: #{tpu_custom_call.1} parent=1 // loop_body
      %s28 = ssub.s32 %s23, 1
      %s29 = ssub.s32 %s23, 2
      %s36 = sadd.s32 1, %s31
      %p37 = scmp.ge.s32.totalorder %s36, 4
      %s38 = scalar_select %p37, 0, %s36
      %s39 = sadd.s32 1, %s30
      %s40 = scalar_select %p37, %s39, %s30
      %p41 = scmp.ge.s32.totalorder %s40, 2
      %s42 = scalar_select %p41, 0, %s40
      %s43 = ssub.s32 %s30, %s42
      %p44 = scmp.eq.s32.totalorder %s43, 0
      %s46 = sadd.s32 %s45, 1
      %s47 = scalar_select %p44, %s45, %s46
      %p50 = pneg %p44
      %p51 = scmp.eq.s32.totalorder %s23, 7
      %p52 = por %p50, %p51
      %p53 = scmp.ne.s32.totalorder %s45, %s48
      %p54 = scmp.eq.s32.totalorder %s23, 0
      %p55 = por %p53, %p54
      %p56 = scmp.ne.s32.totalorder %s45, %s48
      %p57 = scmp.eq.s32.totalorder %s28, 7
      %p58 = por %p56, %p57
      %p59 = scmp.ne.s32.totalorder %s48, %s49
      %p60 = scmp.eq.s32.totalorder %s28, 0
      %p61 = por %p59, %p60
      %p62 = scmp.ne.s32.totalorder %s48, %s49
      %p63 = scmp.eq.s32.totalorder %s29, 7
      %p64 = por %p62, %p63
      %p66 = scmp.ne.s32.totalorder %s49, %s65
      %p67 = scmp.eq.s32.totalorder %s29, 0
      %p68 = por %p66, %p67
      %s69 = ssub.s32 %s31, %s38
      %p70 = scmp.eq.s32.totalorder %s69, 0
      %s72 = sadd.s32 %s71, 1
      %s73 = scalar_select %p70, %s71, %s72
      %p76 = pneg %p70
      %p77 = scmp.eq.s32.totalorder %s23, 7
      %p78 = por %p76, %p77
      %p79 = scmp.ne.s32.totalorder %s71, %s74
      %p80 = scmp.eq.s32.totalorder %s23, 0
      %p81 = por %p79, %p80
      %p82 = scmp.ne.s32.totalorder %s71, %s74
      %p83 = scmp.eq.s32.totalorder %s28, 7
      %p84 = por %p82, %p83
      %p85 = scmp.ne.s32.totalorder %s74, %s75
      %p86 = scmp.eq.s32.totalorder %s28, 0
      %p87 = por %p85, %p86
      %p88 = scmp.ne.s32.totalorder %s74, %s75
      %p89 = scmp.eq.s32.totalorder %s29, 7
      %p90 = por %p88, %p89
      %p92 = scmp.ne.s32.totalorder %s75, %s91
      %p93 = scmp.eq.s32.totalorder %s29, 0
      %p94 = por %p92, %p93
      %s95 = ssub.s32 %s31, %s38
      %p96 = scmp.eq.s32.totalorder %s95, 0
      %s98 = sadd.s32 %s97, 1
      %s99 = scalar_select %p96, %s97, %s98
      %p102 = pneg %p96
      %p103 = scmp.eq.s32.totalorder %s23, 7
      %p104 = por %p102, %p103
      %p105 = scmp.ne.s32.totalorder %s97, %s100
      %p106 = scmp.eq.s32.totalorder %s23, 0
      %p107 = por %p105, %p106
      %p108 = scmp.ne.s32.totalorder %s97, %s100
      %p109 = scmp.eq.s32.totalorder %s28, 7
      %p110 = por %p108, %p109
      %p111 = scmp.ne.s32.totalorder %s100, %s101
      %p112 = scmp.eq.s32.totalorder %s28, 0
      %p113 = por %p111, %p112
      %p114 = scmp.ne.s32.totalorder %s100, %s101
      %p115 = scmp.eq.s32.totalorder %s29, 7
      %p116 = por %p114, %p115
      %p118 = scmp.ne.s32.totalorder %s101, %s117
      %p119 = scmp.eq.s32.totalorder %s29, 0
      %p120 = por %p118, %p119
      %s121 = ssub.s32 %s31, %s38
      %p122 = scmp.eq.s32.totalorder %s121, 0
      %s124 = sadd.s32 %s123, 1
      %s125 = scalar_select %p122, %s123, %s124
      %p128 = pneg %p122
      %p129 = scmp.eq.s32.totalorder %s23, 7
      %p130 = por %p128, %p129
      %p131 = scmp.ne.s32.totalorder %s123, %s126
      %p132 = scmp.eq.s32.totalorder %s23, 0
      %p133 = por %p131, %p132
      %p134 = scmp.ne.s32.totalorder %s123, %s126
      %p135 = scmp.eq.s32.totalorder %s28, 7
      %p136 = por %p134, %p135
      %p137 = scmp.ne.s32.totalorder %s126, %s127
      %p138 = scmp.eq.s32.totalorder %s28, 0
      %p139 = por %p137, %p138
      %p140 = scmp.ne.s32.totalorder %s126, %s127
      %p141 = scmp.eq.s32.totalorder %s29, 7
      %p142 = por %p140, %p141
      %p144 = scmp.ne.s32.totalorder %s127, %s143
      %p145 = scmp.eq.s32.totalorder %s29, 0
      %p146 = por %p144, %p145
      %s148 = sadd.s32 %s147, 1
      %p151 = scmp.eq.s32.totalorder %s23, 7
      %p152 = scmp.ne.s32.totalorder %s147, %s149
      %p153 = scmp.eq.s32.totalorder %s23, 0
      %p154 = por %p152, %p153
      %p155 = scmp.ne.s32.totalorder %s147, %s149
      %p156 = scmp.eq.s32.totalorder %s28, 7
      %p157 = por %p155, %p156
      %p158 = scmp.ne.s32.totalorder %s149, %s150
      %p159 = scmp.eq.s32.totalorder %s28, 0
      %p160 = por %p158, %p159
      %p161 = scmp.ne.s32.totalorder %s149, %s150
      %p162 = scmp.eq.s32.totalorder %s29, 7
      %p163 = por %p161, %p162
      %p165 = scmp.ne.s32.totalorder %s150, %s164
      %p166 = scmp.eq.s32.totalorder %s29, 0
      %p167 = por %p165, %p166
      %s168 = ssub.s32 %s30, %s42
      %p169 = scmp.eq.s32.totalorder %s168, 0
      %s171 = sadd.s32 %s170, 1
      %s172 = scalar_select %p169, %s170, %s171
      %p175 = pneg %p169
      %p176 = scmp.eq.s32.totalorder %s23, 7
      %p177 = por %p175, %p176
      %p178 = scmp.ne.s32.totalorder %s170, %s173
      %p179 = scmp.eq.s32.totalorder %s23, 0
      %p180 = por %p178, %p179
      %p181 = scmp.ne.s32.totalorder %s170, %s173
      %p182 = scmp.eq.s32.totalorder %s28, 7
      %p183 = por %p181, %p182
      %p184 = scmp.ne.s32.totalorder %s173, %s174
      %p185 = scmp.eq.s32.totalorder %s28, 0
      %p186 = por %p184, %p185
      %p187 = scmp.ne.s32.totalorder %s173, %s174
      %p188 = scmp.eq.s32.totalorder %s29, 7
      %p189 = por %p187, %p188
      %p191 = scmp.ne.s32.totalorder %s174, %s190
      %p192 = scmp.eq.s32.totalorder %s29, 0
      %p193 = por %p191, %p192
      %p194 = scmp.le.s32.totalorder 1, %s23
      %p195 = scmp.lt.s32.totalorder %s23, 9
      %p196 = pnand %p194, %p195
      %p197 = pneg %p196
      // Predicated region
      $region9: #{tpu_custom_call.1} parent=5 // pred_check
        _
      $region10: #{tpu_custom_call.1} parent=5 // pred_check_branch
        %199 = sbr.rel (%p196) target = $region12
      $region11: #{tpu_custom_call.1} parent=5 // pred_region
        %s200 = ssub.s32 %s23, 1
        // Predicated region
        $region13: #{tpu_custom_call.1} parent=11 // pred_check
          %p201 = pneg %p160
        $region14: #{tpu_custom_call.1} parent=11 // pred_check_branch
          %203 = sbr.rel (%p201) target = $region16
        $region15: #{tpu_custom_call.1} parent=11 // pred_region
          _
        $region16: #{tpu_custom_call.1} parent=11 // pred_fallthru
          _
      $region12: #{tpu_custom_call.1} parent=5 // pred_fallthru
        _
      %p204 = scmp.lt.s32.totalorder %s23, 8
      // Predicated region
      $region17: #{tpu_custom_call.1} parent=5 // pred_check
        %p205 = pneg %p204
      $region18: #{tpu_custom_call.1} parent=5 // pred_check_branch
        %207 = sbr.rel (%p205) target = $region20
      $region19: #{tpu_custom_call.1} parent=5 // pred_region
        // Predicated region
        $region21: #{tpu_custom_call.1} parent=19 // pred_check
          %p208 = pneg %p55
        $region22: #{tpu_custom_call.1} parent=19 // pred_check_branch
          %210 = sbr.rel (%p208) target = $region24
        $region23: #{tpu_custom_call.1} parent=19 // pred_region
          %s211 = sand.u32 %s45, 1
          %s212 = scalar_lea.sflag [#allocation4], %s211
          %s213 = sand.u32 %s45, 1
          %s214 = smul.addr %s213, 64
          %s215 = scalar_lea.vmem [#allocation3], %s214
          %s216 = smul.u32 8, %s30
          %s218 = ssub.s32 1024, 1024
          %219 = vsyncadd %s212, %s218
          %s220 = smul.addr %s216, 2
          %s221 = smul.addr %s220, 64
          %s222 = scalar_lea.hbm %s0, %s221
          %s223 = sshll.u32 %s215, 4
          %s224 = int_to_ptr.vmem [resolvable:$true] %s223
          %229 = dma.hbm_to_vmem [thread:$0]  %s222, 1024, %s224, %s212, 128, 128, 8
        $region24: #{tpu_custom_call.1} parent=19 // pred_fallthru
          _
        // Predicated region
        $region25: #{tpu_custom_call.1} parent=19 // pred_check
          %p230 = pneg %p81
        $region26: #{tpu_custom_call.1} parent=19 // pred_check_branch
          %232 = sbr.rel (%p230) target = $region28
        $region27: #{tpu_custom_call.1} parent=19 // pred_region
          %s233 = sand.u32 %s23, 1
          %s234 = scalar_lea.sflag [#allocation7], %s233
          %s235 = sand.u32 %s71, 1
          %s236 = smul.addr %s235, 128
          %s237 = scalar_lea.vmem [#allocation6], %s236
          %s238 = smul.u32 16, %s31
          %s240 = ssub.s32 2048, 2048
          %241 = vsyncadd %s234, %s240
          %s242 = smul.addr %s238, 2
          %s243 = smul.addr %s242, 64
          %s244 = scalar_lea.hbm %s1, %s243
          %s245 = sshll.u32 %s237, 4
          %s246 = int_to_ptr.vmem [resolvable:$true] %s245
          %251 = dma.hbm_to_vmem [thread:$0]  %s244, 2048, %s246, %s234, 128, 128, 8
        $region28: #{tpu_custom_call.1} parent=19 // pred_fallthru
          _
        // Predicated region
        $region29: #{tpu_custom_call.1} parent=19 // pred_check
          %p252 = pneg %p107
        $region30: #{tpu_custom_call.1} parent=19 // pred_check_branch
          %254 = sbr.rel (%p252) target = $region32
        $region31: #{tpu_custom_call.1} parent=19 // pred_region
          %s255 = sand.u32 %s23, 1
          %s256 = scalar_lea.sflag [#allocation7], %s255
          %s257 = sand.u32 %s97, 1
          %s258 = scalar_lea.vmem [#allocation8], %s257
          %s260 = ssub.s32 16, 16
          %261 = vsyncadd %s256, %s260
          %s262 = smul.addr %s31, 16
          %s263 = scalar_lea.hbm %s2, %s262
          %s265 = sshll.u32 %s258, 4
          %s266 = int_to_ptr.vmem [resolvable:$true] %s265
          %268 = dma.hbm_to_vmem [thread:$0]  %s263, 16, %s266, %s256
        $region32: #{tpu_custom_call.1} parent=19 // pred_fallthru
          _
        // Predicated region
        $region33: #{tpu_custom_call.1} parent=19 // pred_check
          %p269 = pneg %p133
        $region34: #{tpu_custom_call.1} parent=19 // pred_check_branch
          %271 = sbr.rel (%p269) target = $region36
        $region35: #{tpu_custom_call.1} parent=19 // pred_region
          %s272 = sand.u32 %s123, 1
          %s273 = scalar_lea.sflag [#allocation10], %s272
          %s274 = sand.u32 %s123, 1
          %s275 = smul.addr %s274, 128
          %s276 = scalar_lea.vmem [#allocation9], %s275
          %s278 = ssub.s32 2048, 2048
          %279 = vsyncadd %s273, %s278
          %s280 = smul.addr %s31, 64
          %s281 = scalar_lea.hbm %s3, %s280
          %s282 = sshll.u32 %s276, 4
          %s283 = int_to_ptr.vmem [resolvable:$true] %s282
          %288 = dma.hbm_to_vmem [thread:$0]  %s281, 2048, %s283, %s273, 256, 64, 4
        $region36: #{tpu_custom_call.1} parent=19 // pred_fallthru
          _
      $region20: #{tpu_custom_call.1} parent=5 // pred_fallthru
        _
      %p289 = scmp.le.s32.totalorder 1, %s23
      %p290 = scmp.lt.s32.totalorder %s23, 9
      %p291 = pnand %p289, %p290
      %p292 = pneg %p291
      // Predicated region
      $region37: #{tpu_custom_call.1} parent=5 // pred_check
        _
      $region38: #{tpu_custom_call.1} parent=5 // pred_check_branch
        %294 = sbr.rel (%p291) target = $region40
      $region39: #{tpu_custom_call.1} parent=5 // pred_region
        %s295 = ssub.s32 %s23, 1
        %s296 = sand.u32 %s48, 1
        %s297 = scalar_lea.sflag [#allocation4], %s296
        %s298 = sand.u32 %s48, 1
        %s299 = smul.addr %s298, 64
        %s300 = scalar_lea.vmem [#allocation3], %s299
        // Predicated region
        $region41: #{tpu_custom_call.1} parent=39 // pred_check
          %p301 = pneg %p61
        $region42: #{tpu_custom_call.1} parent=39 // pred_check_branch
          %303 = sbr.rel (%p301) target = $region44
        $region43: #{tpu_custom_call.1} parent=39 // pred_region
          %304 = dma.done %s297, 1024
        $region44: #{tpu_custom_call.1} parent=39 // pred_fallthru
          _
        %s305 = sand.u32 %s28, 1
        %s306 = scalar_lea.sflag [#allocation7], %s305
        %s307 = sand.u32 %s74, 1
        %s308 = smul.addr %s307, 128
        %s309 = scalar_lea.vmem [#allocation6], %s308
        // Predicated region
        $region45: #{tpu_custom_call.1} parent=39 // pred_check
          %p310 = pneg %p87
        $region46: #{tpu_custom_call.1} parent=39 // pred_check_branch
          %312 = sbr.rel (%p310) target = $region48
        $region47: #{tpu_custom_call.1} parent=39 // pred_region
          %313 = dma.done %s306, 2048
        $region48: #{tpu_custom_call.1} parent=39 // pred_fallthru
          _
        %s314 = sand.u32 %s28, 1
        %s315 = scalar_lea.sflag [#allocation7], %s314
        %s316 = sand.u32 %s100, 1
        %s317 = scalar_lea.vmem [#allocation8], %s316
        // Predicated region
        $region49: #{tpu_custom_call.1} parent=39 // pred_check
          %p318 = pneg %p113
        $region50: #{tpu_custom_call.1} parent=39 // pred_check_branch
          %320 = sbr.rel (%p318) target = $region52
        $region51: #{tpu_custom_call.1} parent=39 // pred_region
          %321 = dma.done %s315, 16
        $region52: #{tpu_custom_call.1} parent=39 // pred_fallthru
          _
        %s322 = sand.u32 %s126, 1
        %s323 = scalar_lea.sflag [#allocation10], %s322
        %s324 = sand.u32 %s126, 1
        %s325 = smul.addr %s324, 128
        %s326 = scalar_lea.vmem [#allocation9], %s325
        // Predicated region
        $region53: #{tpu_custom_call.1} parent=39 // pred_check
          %p327 = pneg %p139
        $region54: #{tpu_custom_call.1} parent=39 // pred_check_branch
          %329 = sbr.rel (%p327) target = $region56
        $region55: #{tpu_custom_call.1} parent=39 // pred_region
          %330 = dma.done %s323, 2048
        $region56: #{tpu_custom_call.1} parent=39 // pred_fallthru
          _
        %s331 = sand.u32 %s48, 1
        %s332 = scalar_lea.sflag [#allocation4], %s331
        %s333 = sand.u32 %s48, 1
        %s334 = smul.addr %s333, 64
        %s335 = scalar_lea.vmem [#allocation3], %s334
        %p336 = pneg %p61
        %p337 = pneg %p58
        %s338 = sand.u32 %s28, 1
        %s339 = scalar_lea.sflag [#allocation7], %s338
        %s340 = sand.u32 %s74, 1
        %s341 = smul.addr %s340, 128
        %s342 = scalar_lea.vmem [#allocation6], %s341
        %p343 = pneg %p87
        %p344 = pneg %p84
        %s345 = sand.u32 %s28, 1
        %s346 = scalar_lea.sflag [#allocation7], %s345
        %s347 = sand.u32 %s100, 1
        %s348 = scalar_lea.vmem [#allocation8], %s347
        %p349 = pneg %p113
        %p350 = pneg %p110
        %s351 = sand.u32 %s126, 1
        %s352 = scalar_lea.sflag [#allocation10], %s351
        %s353 = sand.u32 %s126, 1
        %s354 = smul.addr %s353, 128
        %s355 = scalar_lea.vmem [#allocation9], %s354
        %p356 = pneg %p139
        %p357 = pneg %p136
        %p358 = pneg %p160
        %p359 = pneg %p157
        %p360 = pneg %p186
        %p361 = pneg %p183
        %s362 = sand.u32 %s173, 1
        %s363 = scalar_lea.sflag [#allocation5], %s362
        %s364 = sand.u32 %s173, 1
        %s365 = smul.addr %s364, 128
        %s366 = scalar_lea.vmem [#allocation11], %s365
        %s367 = smul.u32 8, %s32
        %s368 = smul.u32 16, %s33
        %s369 = smul.u32 8, %s32
        %p371 = scmp.eq.s32.totalorder %s33, 0
        // Predicated region
        $region57: #{tpu_custom_call.1} parent=39 // pred_check
          %p372 = pneg %p371
        $region58: #{tpu_custom_call.1} parent=39 // pred_check_branch
          %374 = sbr.rel (%p372) target = $region60
        $region59: #{tpu_custom_call.1} parent=39 // pred_region
          %v375 = vld [vmem:[%s4] sm:$0x3]
          %v377 = vlaneseq
          %v378 = vshrl.u32 %v377, 7
          %v379 = vsub.s32 0, %v378
          %v380 = vrot.slane %v375, %v379
          %v381 = vlaneseq
          %v382 = vshrl.u32 %v381, 7
          %v383 = vsub.s32 1, %v382
          %v384 = vrot.slane %v375, %v383
          %387 = vst [vmem:[#allocation2] sm:$0xff] %v380
          %388 = vst [vmem:[#allocation2 + $0x8] sm:$0xff] %v384
          %389 = vst [vmem:[#allocation2 + $0x10] sm:$0xff] %v380
          %390 = vst [vmem:[#allocation2 + $0x18] sm:$0xff] %v384
          %391 = vst [vmem:[#allocation2 + $0x20] sm:$0xff] %v380
          %392 = vst [vmem:[#allocation2 + $0x28] sm:$0xff] %v384
          %393 = vst [vmem:[#allocation2 + $0x30] sm:$0xff] %v380
          %394 = vst [vmem:[#allocation2 + $0x38] sm:$0xff] %v384
          %395 = vst [vmem:[#allocation2 + $0x40] sm:$0xff] %v380
          %396 = vst [vmem:[#allocation2 + $0x48] sm:$0xff] %v384
          %397 = vst [vmem:[#allocation2 + $0x50] sm:$0xff] %v380
          %398 = vst [vmem:[#allocation2 + $0x58] sm:$0xff] %v384
          %399 = vst [vmem:[#allocation2 + $0x60] sm:$0xff] %v380
          %400 = vst [vmem:[#allocation2 + $0x68] sm:$0xff] %v384
          %401 = vst [vmem:[#allocation2 + $0x70] sm:$0xff] %v380
          %402 = vst [vmem:[#allocation2 + $0x78] sm:$0xff] %v384
        $region60: #{tpu_custom_call.1} parent=39 // pred_fallthru
          _
        %v403 = vld [vmem:[%s300] sm:$0xff]
        %v404 = vld [vmem:[%s300 + $0x8] sm:$0xff]
        %v405 = vld [vmem:[%s300 + $0x10] sm:$0xff]
        %v406 = vld [vmem:[%s300 + $0x18] sm:$0xff]
        %v407 = vld [vmem:[%s300 + $0x20] sm:$0xff]
        %v408 = vld [vmem:[%s300 + $0x28] sm:$0xff]
        %v409 = vld [vmem:[%s300 + $0x30] sm:$0xff]
        %v410 = vld [vmem:[%s300 + $0x38] sm:$0xff]
        %v411 = vld [vmem:[%s309] sm:$0xff]
        %v412 = vld [vmem:[%s309 + $0x8] sm:$0xff]
        %v413 = vld [vmem:[%s309 + $0x10] sm:$0xff]
        %v414 = vld [vmem:[%s309 + $0x18] sm:$0xff]
        %v415 = vld [vmem:[%s309 + $0x20] sm:$0xff]
        %v416 = vld [vmem:[%s309 + $0x28] sm:$0xff]
        %v417 = vld [vmem:[%s309 + $0x30] sm:$0xff]
        %v418 = vld [vmem:[%s309 + $0x38] sm:$0xff]
        %v419 = vld [vmem:[%s309 + $0x40] sm:$0xff]
        %v420 = vld [vmem:[%s309 + $0x48] sm:$0xff]
        %v421 = vld [vmem:[%s309 + $0x50] sm:$0xff]
        %v422 = vld [vmem:[%s309 + $0x58] sm:$0xff]
        %v423 = vld [vmem:[%s309 + $0x60] sm:$0xff]
        %v424 = vld [vmem:[%s309 + $0x68] sm:$0xff]
        %v425 = vld [vmem:[%s309 + $0x70] sm:$0xff]
        %v426 = vld [vmem:[%s309 + $0x78] sm:$0xff]
        %v427 = vld [vmem:[%s317] sm:$0x1]
        %v429 = vlaneseq
        %v430 = vshrl.u32 %v429, 7
        %v431 = vsub.s32 0, %v430
        %v432 = vrot.slane %v427, %v431
        %v442 = vunpack.c.l.b16 %v403
        %v443 = vunpack.c.h.b16 %v403
        %v444 = vunpack.c.l.b16 %v404
        %v445 = vunpack.c.h.b16 %v404
        %v446 = vunpack.c.l.b16 %v405
        %v447 = vunpack.c.h.b16 %v405
        %v448 = vunpack.c.l.b16 %v406
        %v449 = vunpack.c.h.b16 %v406
        %v450 = vunpack.c.l.b16 %v407
        %v451 = vunpack.c.h.b16 %v407
        %v452 = vunpack.c.l.b16 %v408
        %v453 = vunpack.c.h.b16 %v408
        %v454 = vunpack.c.l.b16 %v409
        %v455 = vunpack.c.h.b16 %v409
        %v456 = vunpack.c.l.b16 %v410
        %v457 = vunpack.c.h.b16 %v410
        %v458 = vpack.c.b16 %v444, %v442
        %v459 = vpack.c.b16 %v445, %v443
        %v460 = vpack.c.b16 %v448, %v446
        %v461 = vpack.c.b16 %v449, %v447
        %v462 = vpack.c.b16 %v452, %v450
        %v463 = vpack.c.b16 %v453, %v451
        %v464 = vpack.c.b16 %v456, %v454
        %v465 = vpack.c.b16 %v457, %v455
        %v490 = vunpack.c.l.b16 %v411
        %v491 = vunpack.c.h.b16 %v411
        %v492 = vunpack.c.l.b16 %v412
        %v493 = vunpack.c.h.b16 %v412
        %v494 = vunpack.c.l.b16 %v413
        %v495 = vunpack.c.h.b16 %v413
        %v496 = vunpack.c.l.b16 %v414
        %v497 = vunpack.c.h.b16 %v414
        %v498 = vunpack.c.l.b16 %v415
        %v499 = vunpack.c.h.b16 %v415
        %v500 = vunpack.c.l.b16 %v416
        %v501 = vunpack.c.h.b16 %v416
        %v502 = vunpack.c.l.b16 %v417
        %v503 = vunpack.c.h.b16 %v417
        %v504 = vunpack.c.l.b16 %v418
        %v505 = vunpack.c.h.b16 %v418
        %v506 = vunpack.c.l.b16 %v419
        %v507 = vunpack.c.h.b16 %v419
        %v508 = vunpack.c.l.b16 %v420
        %v509 = vunpack.c.h.b16 %v420
        %v510 = vunpack.c.l.b16 %v421
        %v511 = vunpack.c.h.b16 %v421
        %v512 = vunpack.c.l.b16 %v422
        %v513 = vunpack.c.h.b16 %v422
        %v514 = vunpack.c.l.b16 %v423
        %v515 = vunpack.c.h.b16 %v423
        %v516 = vunpack.c.l.b16 %v424
        %v517 = vunpack.c.h.b16 %v424
        %v518 = vunpack.c.l.b16 %v425
        %v519 = vunpack.c.h.b16 %v425
        %v520 = vunpack.c.l.b16 %v426
        %v521 = vunpack.c.h.b16 %v426
        %v522 = vpack.c.b16 %v492, %v490
        %v523 = vpack.c.b16 %v493, %v491
        %v524 = vpack.c.b16 %v496, %v494
        %v525 = vpack.c.b16 %v497, %v495
        %v526 = vpack.c.b16 %v500, %v498
        %v527 = vpack.c.b16 %v501, %v499
        %v528 = vpack.c.b16 %v504, %v502
        %v529 = vpack.c.b16 %v505, %v503
        %v530 = vpack.c.b16 %v508, %v506
        %v531 = vpack.c.b16 %v509, %v507
        %v532 = vpack.c.b16 %v512, %v510
        %v533 = vpack.c.b16 %v513, %v511
        %v534 = vpack.c.b16 %v516, %v514
        %v535 = vpack.c.b16 %v517, %v515
        %v536 = vpack.c.b16 %v520, %v518
        %v537 = vpack.c.b16 %v521, %v519
        %554 = vmatprep.subr.bf16.mxu0 %v537
        %555 = vmatpush1.bf16.xpose.msra.mxu0 %v536
        %556 = vmatprep.subr.bf16.mxu0 %v535
        %557 = vmatpush1.bf16.xpose.msra.mxu0 %v534
        %558 = vmatprep.subr.bf16.mxu0 %v533
        %559 = vmatpush1.bf16.xpose.msra.mxu0 %v532
        %560 = vmatprep.subr.bf16.mxu0 %v531
        %561 = vmatpush1.bf16.xpose.msra.mxu0 %v530
        %562 = vmatprep.subr.bf16.mxu0 %v529
        %563 = vmatpush1.bf16.xpose.msra.mxu0 %v528
        %564 = vmatprep.subr.bf16.mxu0 %v527
        %565 = vmatpush1.bf16.xpose.msra.mxu0 %v526
        %566 = vmatprep.subr.bf16.mxu0 %v525
        %567 = vmatpush1.bf16.xpose.msra.mxu0 %v524
        %568 = vmatprep.subr.bf16.mxu0 %v523
        %569 = vmatpush1.bf16.xpose.msra.mxu0 %v522
        %570 = vmatprep.subr.bf16.mxu0 0
        %571 = vmatpush2.bf16.xpose.msra.mxu0 0
        %572 = vmatprep.subr.bf16.mxu0 0
        %573 = vmatpush2.bf16.xpose.msra.mxu0 0
        %574 = vmatprep.subr.bf16.mxu0 0
        %575 = vmatpush2.bf16.xpose.msra.mxu0 0
        %576 = vmatprep.subr.bf16.mxu0 0
        %577 = vmatpush2.bf16.xpose.msra.mxu0 0
        %578 = vmatprep.subr.bf16.mxu0 0
        %579 = vmatpush2.bf16.xpose.msra.mxu0 0
        %580 = vmatprep.subr.bf16.mxu0 0
        %581 = vmatpush2.bf16.xpose.msra.mxu0 0
        %582 = vmatprep.subr.bf16.mxu0 0
        %583 = vmatpush2.bf16.xpose.msra.mxu0 0
        %584 = vmatprep.subr.bf16.mxu0 0
        %585 = vmatpush2.bf16.xpose.msra.mxu0 0
        %586 = vmatprep.mubr.bf16.mxu0 %v459
        %587 = vmatmul.mubr.bf16.gmra.mxu0 %v458
        %v588 = vpop.f32.mrf.mxu0
        %v589 = vadd.f32 %v432, %v588
        %v590 = vpop.f32.mrf.mxu0
        %v591 = vpop.f32.mrf.mxu0
        %v592 = vadd.f32 %v432, %v591
        %v593 = vpop.f32.mrf.mxu0
        %594 = vmatprep.mubr.bf16.mxu0 %v461
        %595 = vmatmul.mubr.bf16.gmra.mxu0 %v460
        %v596 = vpop.f32.mrf.mxu0
        %v597 = vadd.f32 %v432, %v596
        %v598 = vpop.f32.mrf.mxu0
        %v599 = vpop.f32.mrf.mxu0
        %v600 = vadd.f32 %v432, %v599
        %v601 = vpop.f32.mrf.mxu0
        %602 = vmatprep.mubr.bf16.mxu0 %v463
        %603 = vmatmul.mubr.bf16.gmra.mxu0 %v462
        %v604 = vpop.f32.mrf.mxu0
        %v605 = vadd.f32 %v432, %v604
        %v606 = vpop.f32.mrf.mxu0
        %v607 = vpop.f32.mrf.mxu0
        %v608 = vadd.f32 %v432, %v607
        %v609 = vpop.f32.mrf.mxu0
        %610 = vmatprep.mubr.bf16.mxu0 %v465
        %611 = vmatmul.mubr.bf16.gmra.mxu0 %v464
        %v612 = vpop.f32.mrf.mxu0
        %v613 = vadd.f32 %v432, %v612
        %v614 = vpop.f32.mrf.mxu0
        %v615 = vpop.f32.mrf.mxu0
        %v616 = vadd.f32 %v432, %v615
        %v617 = vpop.f32.mrf.mxu0
        %618 = vdwg.mxu0
        %v619 = vmul.f32 %v589, 0.5
        %v620 = vmul.f32 %v592, 0.5
        %v621 = vmul.f32 %v597, 0.5
        %v622 = vmul.f32 %v600, 0.5
        %v623 = vmul.f32 %v605, 0.5
        %v624 = vmul.f32 %v608, 0.5
        %v625 = vmul.f32 %v613, 0.5
        %v626 = vmul.f32 %v616, 0.5
        %v627 = vmul.f32 %v589, 0.70710677
        %v628 = vmul.f32 %v592, 0.70710677
        %v629 = vmul.f32 %v597, 0.70710677
        %v630 = vmul.f32 %v600, 0.70710677
        %v631 = vmul.f32 %v605, 0.70710677
        %v632 = vmul.f32 %v608, 0.70710677
        %v633 = vmul.f32 %v613, 0.70710677
        %v634 = vmul.f32 %v616, 0.70710677
        %vm635 = vcmp.ge.f32.partialorder %v627, 0.0
        %vm636 = vcmp.ge.f32.partialorder %v628, 0.0
        %vm637 = vcmp.ge.f32.partialorder %v629, 0.0
        %vm638 = vcmp.ge.f32.partialorder %v630, 0.0
        %vm639 = vcmp.ge.f32.partialorder %v631, 0.0
        %vm640 = vcmp.ge.f32.partialorder %v632, 0.0
        %vm641 = vcmp.ge.f32.partialorder %v633, 0.0
        %vm642 = vcmp.ge.f32.partialorder %v634, 0.0
        %v643 = vsel %vm635, 1.0, -1.0
        %v644 = vsel %vm636, 1.0, -1.0
        %v645 = vsel %vm637, 1.0, -1.0
        %v646 = vsel %vm638, 1.0, -1.0
        %v647 = vsel %vm639, 1.0, -1.0
        %v648 = vsel %vm640, 1.0, -1.0
        %v649 = vsel %vm641, 1.0, -1.0
        %v650 = vsel %vm642, 1.0, -1.0
        %v651 = vand.u32 2147483647, %v627
        %v652 = vand.u32 2147483647, %v628
        %v653 = vand.u32 2147483647, %v629
        %v654 = vand.u32 2147483647, %v630
        %v655 = vand.u32 2147483647, %v631
        %v656 = vand.u32 2147483647, %v632
        %v657 = vand.u32 2147483647, %v633
        %v658 = vand.u32 2147483647, %v634
        %v659 = vmul.f32 %v651, 0.3275911
        %v660 = vmul.f32 %v652, 0.3275911
        %v661 = vmul.f32 %v653, 0.3275911
        %v662 = vmul.f32 %v654, 0.3275911
        %v663 = vmul.f32 %v655, 0.3275911
        %v664 = vmul.f32 %v656, 0.3275911
        %v665 = vmul.f32 %v657, 0.3275911
        %v666 = vmul.f32 %v658, 0.3275911
        %v667 = vadd.f32 %v659, 1.0
        %v668 = vadd.f32 %v660, 1.0
        %v669 = vadd.f32 %v661, 1.0
        %v670 = vadd.f32 %v662, 1.0
        %v671 = vadd.f32 %v663, 1.0
        %v672 = vadd.f32 %v664, 1.0
        %v673 = vadd.f32 %v665, 1.0
        %v674 = vadd.f32 %v666, 1.0
        %v675 = vrcp.pop %v667
        %v676 = vrcp.pop %v668
        %v677 = vrcp.pop %v669
        %v678 = vrcp.pop %v670
        %v679 = vrcp.pop %v671
        %v680 = vrcp.pop %v672
        %v681 = vrcp.pop %v673
        %v682 = vrcp.pop %v674
        %v683 = vmul.f32 %v675, 1.0614054
        %v684 = vmul.f32 %v676, 1.0614054
        %v685 = vmul.f32 %v677, 1.0614054
        %v686 = vmul.f32 %v678, 1.0614054
        %v687 = vmul.f32 %v679, 1.0614054
        %v688 = vmul.f32 %v680, 1.0614054
        %v689 = vmul.f32 %v681, 1.0614054
        %v690 = vmul.f32 %v682, 1.0614054
        %v691 = vadd.f32 %v683, -1.4531521
        %v692 = vadd.f32 %v684, -1.4531521
        %v693 = vadd.f32 %v685, -1.4531521
        %v694 = vadd.f32 %v686, -1.4531521
        %v695 = vadd.f32 %v687, -1.4531521
        %v696 = vadd.f32 %v688, -1.4531521
        %v697 = vadd.f32 %v689, -1.4531521
        %v698 = vadd.f32 %v690, -1.4531521
        %v699 = vmul.f32 %v675, %v691
        %v700 = vmul.f32 %v676, %v692
        %v701 = vmul.f32 %v677, %v693
        %v702 = vmul.f32 %v678, %v694
        %v703 = vmul.f32 %v679, %v695
        %v704 = vmul.f32 %v680, %v696
        %v705 = vmul.f32 %v681, %v697
        %v706 = vmul.f32 %v682, %v698
        %v707 = vadd.f32 %v699, 1.4214138
        %v708 = vadd.f32 %v700, 1.4214138
        %v709 = vadd.f32 %v701, 1.4214138
        %v710 = vadd.f32 %v702, 1.4214138
        %v711 = vadd.f32 %v703, 1.4214138
        %v712 = vadd.f32 %v704, 1.4214138
        %v713 = vadd.f32 %v705, 1.4214138
        %v714 = vadd.f32 %v706, 1.4214138
        %v715 = vmul.f32 %v675, %v707
        %v716 = vmul.f32 %v676, %v708
        %v717 = vmul.f32 %v677, %v709
        %v718 = vmul.f32 %v678, %v710
        %v719 = vmul.f32 %v679, %v711
        %v720 = vmul.f32 %v680, %v712
        %v721 = vmul.f32 %v681, %v713
        %v722 = vmul.f32 %v682, %v714
        %v723 = vadd.f32 %v715, -0.28449672
        %v724 = vadd.f32 %v716, -0.28449672
        %v725 = vadd.f32 %v717, -0.28449672
        %v726 = vadd.f32 %v718, -0.28449672
        %v727 = vadd.f32 %v719, -0.28449672
        %v728 = vadd.f32 %v720, -0.28449672
        %v729 = vadd.f32 %v721, -0.28449672
        %v730 = vadd.f32 %v722, -0.28449672
        %v731 = vmul.f32 %v675, %v723
        %v732 = vmul.f32 %v676, %v724
        %v733 = vmul.f32 %v677, %v725
        %v734 = vmul.f32 %v678, %v726
        %v735 = vmul.f32 %v679, %v727
        %v736 = vmul.f32 %v680, %v728
        %v737 = vmul.f32 %v681, %v729
        %v738 = vmul.f32 %v682, %v730
        %v739 = vadd.f32 %v731, 0.2548296
        %v740 = vadd.f32 %v732, 0.2548296
        %v741 = vadd.f32 %v733, 0.2548296
        %v742 = vadd.f32 %v734, 0.2548296
        %v743 = vadd.f32 %v735, 0.2548296
        %v744 = vadd.f32 %v736, 0.2548296
        %v745 = vadd.f32 %v737, 0.2548296
        %v746 = vadd.f32 %v738, 0.2548296
        %v747 = vmul.f32 %v675, %v739
        %v748 = vmul.f32 %v676, %v740
        %v749 = vmul.f32 %v677, %v741
        %v750 = vmul.f32 %v678, %v742
        %v751 = vmul.f32 %v679, %v743
        %v752 = vmul.f32 %v680, %v744
        %v753 = vmul.f32 %v681, %v745
        %v754 = vmul.f32 %v682, %v746
        %v755 = vsub.f32 0.0, %v651
        %v756 = vsub.f32 0.0, %v652
        %v757 = vsub.f32 0.0, %v653
        %v758 = vsub.f32 0.0, %v654
        %v759 = vsub.f32 0.0, %v655
        %v760 = vsub.f32 0.0, %v656
        %v761 = vsub.f32 0.0, %v657
        %v762 = vsub.f32 0.0, %v658
        %v763 = vmul.f32 %v755, %v651
        %v764 = vmul.f32 %v756, %v652
        %v765 = vmul.f32 %v757, %v653
        %v766 = vmul.f32 %v758, %v654
        %v767 = vmul.f32 %v759, %v655
        %v768 = vmul.f32 %v760, %v656
        %v769 = vmul.f32 %v761, %v657
        %v770 = vmul.f32 %v762, %v658
        %v771 = vmul.f32 %v763, 1.442695
        %v772 = vpow.pop %v771
        %v773 = vmul.f32 %v764, 1.442695
        %v774 = vpow.pop %v773
        %v775 = vmul.f32 %v765, 1.442695
        %v776 = vpow.pop %v775
        %v777 = vmul.f32 %v766, 1.442695
        %v778 = vpow.pop %v777
        %v779 = vmul.f32 %v767, 1.442695
        %v780 = vpow.pop %v779
        %v781 = vmul.f32 %v768, 1.442695
        %v782 = vpow.pop %v781
        %v783 = vmul.f32 %v769, 1.442695
        %v784 = vpow.pop %v783
        %v785 = vmul.f32 %v770, 1.442695
        %v786 = vpow.pop %v785
        %v787 = vmul.f32 %v747, %v772
        %v788 = vmul.f32 %v748, %v774
        %v789 = vmul.f32 %v749, %v776
        %v790 = vmul.f32 %v750, %v778
        %v791 = vmul.f32 %v751, %v780
        %v792 = vmul.f32 %v752, %v782
        %v793 = vmul.f32 %v753, %v784
        %v794 = vmul.f32 %v754, %v786
        %v795 = vsub.f32 1.0, %v787
        %v796 = vsub.f32 1.0, %v788
        %v797 = vsub.f32 1.0, %v789
        %v798 = vsub.f32 1.0, %v790
        %v799 = vsub.f32 1.0, %v791
        %v800 = vsub.f32 1.0, %v792
        %v801 = vsub.f32 1.0, %v793
        %v802 = vsub.f32 1.0, %v794
        %v803 = vmul.f32 %v643, %v795
        %v804 = vmul.f32 %v644, %v796
        %v805 = vmul.f32 %v645, %v797
        %v806 = vmul.f32 %v646, %v798
        %v807 = vmul.f32 %v647, %v799
        %v808 = vmul.f32 %v648, %v800
        %v809 = vmul.f32 %v649, %v801
        %v810 = vmul.f32 %v650, %v802
        %v811 = vadd.f32 %v803, 1.0
        %v812 = vadd.f32 %v804, 1.0
        %v813 = vadd.f32 %v805, 1.0
        %v814 = vadd.f32 %v806, 1.0
        %v815 = vadd.f32 %v807, 1.0
        %v816 = vadd.f32 %v808, 1.0
        %v817 = vadd.f32 %v809, 1.0
        %v818 = vadd.f32 %v810, 1.0
        %v819 = vmul.f32 %v619, %v811
        %v820 = vmul.f32 %v620, %v812
        %v821 = vmul.f32 %v621, %v813
        %v822 = vmul.f32 %v622, %v814
        %v823 = vmul.f32 %v623, %v815
        %v824 = vmul.f32 %v624, %v816
        %v825 = vmul.f32 %v625, %v817
        %v826 = vmul.f32 %v626, %v818
        %v827 = vld [vmem:[#allocation2] sm:$0xff]
        %v828 = vld [vmem:[#allocation2 + $0x8] sm:$0xff]
        %v829 = vld [vmem:[#allocation2 + $0x10] sm:$0xff]
        %v830 = vld [vmem:[#allocation2 + $0x18] sm:$0xff]
        %v831 = vld [vmem:[#allocation2 + $0x20] sm:$0xff]
        %v832 = vld [vmem:[#allocation2 + $0x28] sm:$0xff]
        %v833 = vld [vmem:[#allocation2 + $0x30] sm:$0xff]
        %v834 = vld [vmem:[#allocation2 + $0x38] sm:$0xff]
        %v835 = vld [vmem:[#allocation2 + $0x40] sm:$0xff]
        %v836 = vld [vmem:[#allocation2 + $0x48] sm:$0xff]
        %v837 = vld [vmem:[#allocation2 + $0x50] sm:$0xff]
        %v838 = vld [vmem:[#allocation2 + $0x58] sm:$0xff]
        %v839 = vld [vmem:[#allocation2 + $0x60] sm:$0xff]
        %v840 = vld [vmem:[#allocation2 + $0x68] sm:$0xff]
        %v841 = vld [vmem:[#allocation2 + $0x70] sm:$0xff]
        %v842 = vld [vmem:[#allocation2 + $0x78] sm:$0xff]
        %v843 = vpack.c.bf16 %v820, %v819
        %v844 = vpack.c.bf16 %v822, %v821
        %v845 = vpack.c.bf16 %v824, %v823
        %v846 = vpack.c.bf16 %v826, %v825
        %v847 = vld [vmem:[%s326] sm:$0xf]
        %v848 = vld [vmem:[%s326 + $0x4] sm:$0xf]
        %v849 = vld [vmem:[%s326 + $0x8] sm:$0xf]
        %v850 = vld [vmem:[%s326 + $0xc] sm:$0xf]
        %v851 = vld [vmem:[%s326 + $0x10] sm:$0xf]
        %v852 = vld [vmem:[%s326 + $0x14] sm:$0xf]
        %v853 = vld [vmem:[%s326 + $0x18] sm:$0xf]
        %v854 = vld [vmem:[%s326 + $0x1c] sm:$0xf]
        %v855 = vld [vmem:[%s326 + $0x20] sm:$0xf]
        %v856 = vld [vmem:[%s326 + $0x24] sm:$0xf]
        %v857 = vld [vmem:[%s326 + $0x28] sm:$0xf]
        %v858 = vld [vmem:[%s326 + $0x2c] sm:$0xf]
        %v859 = vld [vmem:[%s326 + $0x30] sm:$0xf]
        %v860 = vld [vmem:[%s326 + $0x34] sm:$0xf]
        %v861 = vld [vmem:[%s326 + $0x38] sm:$0xf]
        %v862 = vld [vmem:[%s326 + $0x3c] sm:$0xf]
        %v863 = vld [vmem:[%s326 + $0x40] sm:$0xf]
        %v864 = vld [vmem:[%s326 + $0x44] sm:$0xf]
        %v865 = vld [vmem:[%s326 + $0x48] sm:$0xf]
        %v866 = vld [vmem:[%s326 + $0x4c] sm:$0xf]
        %v867 = vld [vmem:[%s326 + $0x50] sm:$0xf]
        %v868 = vld [vmem:[%s326 + $0x54] sm:$0xf]
        %v869 = vld [vmem:[%s326 + $0x58] sm:$0xf]
        %v870 = vld [vmem:[%s326 + $0x5c] sm:$0xf]
        %v871 = vld [vmem:[%s326 + $0x60] sm:$0xf]
        %v872 = vld [vmem:[%s326 + $0x64] sm:$0xf]
        %v873 = vld [vmem:[%s326 + $0x68] sm:$0xf]
        %v874 = vld [vmem:[%s326 + $0x6c] sm:$0xf]
        %v875 = vld [vmem:[%s326 + $0x70] sm:$0xf]
        %v876 = vld [vmem:[%s326 + $0x74] sm:$0xf]
        %v877 = vld [vmem:[%s326 + $0x78] sm:$0xf]
        %v878 = vld [vmem:[%s326 + $0x7c] sm:$0xf]
        %v911 = vunpack.c.l.b16 %v847
        %v912 = vunpack.c.l.b16 %v848
        %v913 = vunpack.c.l.b16 %v849
        %v914 = vunpack.c.l.b16 %v850
        %v915 = vunpack.c.l.b16 %v851
        %v916 = vunpack.c.l.b16 %v852
        %v917 = vunpack.c.l.b16 %v853
        %v918 = vunpack.c.l.b16 %v854
        %v919 = vunpack.c.l.b16 %v855
        %v920 = vunpack.c.l.b16 %v856
        %v921 = vunpack.c.l.b16 %v857
        %v922 = vunpack.c.l.b16 %v858
        %v923 = vunpack.c.l.b16 %v859
        %v924 = vunpack.c.l.b16 %v860
        %v925 = vunpack.c.l.b16 %v861
        %v926 = vunpack.c.l.b16 %v862
        %v927 = vunpack.c.l.b16 %v863
        %v928 = vunpack.c.l.b16 %v864
        %v929 = vunpack.c.l.b16 %v865
        %v930 = vunpack.c.l.b16 %v866
        %v931 = vunpack.c.l.b16 %v867
        %v932 = vunpack.c.l.b16 %v868
        %v933 = vunpack.c.l.b16 %v869
        %v934 = vunpack.c.l.b16 %v870
        %v935 = vunpack.c.l.b16 %v871
        %v936 = vunpack.c.l.b16 %v872
        %v937 = vunpack.c.l.b16 %v873
        %v938 = vunpack.c.l.b16 %v874
        %v939 = vunpack.c.l.b16 %v875
        %v940 = vunpack.c.l.b16 %v876
        %v941 = vunpack.c.l.b16 %v877
        %v942 = vunpack.c.l.b16 %v878
        %v943 = vpack.c.b16 %v912, %v911
        %v944 = vpack.c.b16 %v914, %v913
        %v945 = vpack.c.b16 %v916, %v915
        %v946 = vpack.c.b16 %v918, %v917
        %v947 = vpack.c.b16 %v920, %v919
        %v948 = vpack.c.b16 %v922, %v921
        %v949 = vpack.c.b16 %v924, %v923
        %v950 = vpack.c.b16 %v926, %v925
        %v951 = vpack.c.b16 %v928, %v927
        %v952 = vpack.c.b16 %v930, %v929
        %v953 = vpack.c.b16 %v932, %v931
        %v954 = vpack.c.b16 %v934, %v933
        %v955 = vpack.c.b16 %v936, %v935
        %v956 = vpack.c.b16 %v938, %v937
        %v957 = vpack.c.b16 %v940, %v939
        %v958 = vpack.c.b16 %v942, %v941
        %975 = vmatprep.subr.bf16.mxu0 0
        %976 = vmatpush1.bf16.xpose.msra.mxu0 %v950
        %977 = vmatprep.subr.bf16.mxu0 0
        %978 = vmatpush1.bf16.xpose.msra.mxu0 %v949
        %979 = vmatprep.subr.bf16.mxu0 0
        %980 = vmatpush1.bf16.xpose.msra.mxu0 %v948
        %981 = vmatprep.subr.bf16.mxu0 0
        %982 = vmatpush1.bf16.xpose.msra.mxu0 %v947
        %983 = vmatprep.subr.bf16.mxu0 0
        %984 = vmatpush1.bf16.xpose.msra.mxu0 %v946
        %985 = vmatprep.subr.bf16.mxu0 0
        %986 = vmatpush1.bf16.xpose.msra.mxu0 %v945
        %987 = vmatprep.subr.bf16.mxu0 0
        %988 = vmatpush1.bf16.xpose.msra.mxu0 %v944
        %989 = vmatprep.subr.bf16.mxu0 0
        %990 = vmatpush1.bf16.xpose.msra.mxu0 %v943
        %991 = vmatprep.subr.bf16.mxu0 0
        %992 = vmatpush2.bf16.xpose.msra.mxu0 %v958
        %993 = vmatprep.subr.bf16.mxu0 0
        %994 = vmatpush2.bf16.xpose.msra.mxu0 %v957
        %995 = vmatprep.subr.bf16.mxu0 0
        %996 = vmatpush2.bf16.xpose.msra.mxu0 %v956
        %997 = vmatprep.subr.bf16.mxu0 0
        %998 = vmatpush2.bf16.xpose.msra.mxu0 %v955
        %999 = vmatprep.subr.bf16.mxu0 0
        %1000 = vmatpush2.bf16.xpose.msra.mxu0 %v954
        %1001 = vmatprep.subr.bf16.mxu0 0
        %1002 = vmatpush2.bf16.xpose.msra.mxu0 %v953
        %1003 = vmatprep.subr.bf16.mxu0 0
        %1004 = vmatpush2.bf16.xpose.msra.mxu0 %v952
        %1005 = vmatprep.subr.bf16.mxu0 0
        %1006 = vmatpush2.bf16.xpose.msra.mxu0 %v951
        %1007 = vmatprep.mubr.bf16.mxu0 0
        %1008 = vmatmul.mubr.bf16.gmra.mxu0 %v843
        %v1009 = vpop.f32.mrf.mxu0
        %v1010 = vadd.f32 0.0, %v1009
        %v1011 = vpop.f32.mrf.mxu0
        %v1012 = vadd.f32 0.0, %v1011
        %v1013 = vpop.f32.mrf.mxu0
        %v1014 = vadd.f32 0.0, %v1013
        %v1015 = vpop.f32.mrf.mxu0
        %v1016 = vadd.f32 0.0, %v1015
        %1017 = vmatprep.mubr.bf16.mxu0 0
        %1018 = vmatmul.mubr.bf16.gmra.mxu0 %v844
        %v1019 = vpop.f32.mrf.mxu0
        %v1020 = vadd.f32 0.0, %v1019
        %v1021 = vpop.f32.mrf.mxu0
        %v1022 = vadd.f32 0.0, %v1021
        %v1023 = vpop.f32.mrf.mxu0
        %v1024 = vadd.f32 0.0, %v1023
        %v1025 = vpop.f32.mrf.mxu0
        %v1026 = vadd.f32 0.0, %v1025
        %1027 = vmatprep.mubr.bf16.mxu0 0
        %1028 = vmatmul.mubr.bf16.gmra.mxu0 %v845
        %v1029 = vpop.f32.mrf.mxu0
        %v1030 = vadd.f32 0.0, %v1029
        %v1031 = vpop.f32.mrf.mxu0
        %v1032 = vadd.f32 0.0, %v1031
        %v1033 = vpop.f32.mrf.mxu0
        %v1034 = vadd.f32 0.0, %v1033
        %v1035 = vpop.f32.mrf.mxu0
        %v1036 = vadd.f32 0.0, %v1035
        %1037 = vmatprep.mubr.bf16.mxu0 0
        %1038 = vmatmul.mubr.bf16.gmra.mxu0 %v846
        %v1039 = vpop.f32.mrf.mxu0
        %v1040 = vadd.f32 0.0, %v1039
        %v1041 = vpop.f32.mrf.mxu0
        %v1042 = vadd.f32 0.0, %v1041
        %v1043 = vpop.f32.mrf.mxu0
        %v1044 = vadd.f32 0.0, %v1043
        %v1045 = vpop.f32.mrf.mxu0
        %v1046 = vadd.f32 0.0, %v1045
        %1047 = vdwg.mxu0
        %v1048 = vadd.f32 %v827, %v1010
        %v1049 = vadd.f32 %v828, %v1012
        %v1050 = vadd.f32 %v829, %v1014
        %v1051 = vadd.f32 %v830, %v1016
        %v1052 = vadd.f32 %v831, %v1020
        %v1053 = vadd.f32 %v832, %v1022
        %v1054 = vadd.f32 %v833, %v1024
        %v1055 = vadd.f32 %v834, %v1026
        %v1056 = vadd.f32 %v835, %v1030
        %v1057 = vadd.f32 %v836, %v1032
        %v1058 = vadd.f32 %v837, %v1034
        %v1059 = vadd.f32 %v838, %v1036
        %v1060 = vadd.f32 %v839, %v1040
        %v1061 = vadd.f32 %v840, %v1042
        %v1062 = vadd.f32 %v841, %v1044
        %v1063 = vadd.f32 %v842, %v1046
        %1064 = vst [vmem:[#allocation2] sm:$0xff] %v1048
        %1065 = vst [vmem:[#allocation2 + $0x8] sm:$0xff] %v1049
        %1066 = vst [vmem:[#allocation2 + $0x10] sm:$0xff] %v1050
        %1067 = vst [vmem:[#allocation2 + $0x18] sm:$0xff] %v1051
        %1068 = vst [vmem:[#allocation2 + $0x20] sm:$0xff] %v1052
        %1069 = vst [vmem:[#allocation2 + $0x28] sm:$0xff] %v1053
        %1070 = vst [vmem:[#allocation2 + $0x30] sm:$0xff] %v1054
        %1071 = vst [vmem:[#allocation2 + $0x38] sm:$0xff] %v1055
        %1072 = vst [vmem:[#allocation2 + $0x40] sm:$0xff] %v1056
        %1073 = vst [vmem:[#allocation2 + $0x48] sm:$0xff] %v1057
        %1074 = vst [vmem:[#allocation2 + $0x50] sm:$0xff] %v1058
        %1075 = vst [vmem:[#allocation2 + $0x58] sm:$0xff] %v1059
        %1076 = vst [vmem:[#allocation2 + $0x60] sm:$0xff] %v1060
        %1077 = vst [vmem:[#allocation2 + $0x68] sm:$0xff] %v1061
        %1078 = vst [vmem:[#allocation2 + $0x70] sm:$0xff] %v1062
        %1079 = vst [vmem:[#allocation2 + $0x78] sm:$0xff] %v1063
        %p1080 = scmp.eq.s32.totalorder %s33, 3
        // Predicated region
        $region61: #{tpu_custom_call.1} parent=39 // pred_check
          %p1081 = pneg %p1080
        $region62: #{tpu_custom_call.1} parent=39 // pred_check_branch
          %1083 = sbr.rel (%p1081) target = $region64
        $region63: #{tpu_custom_call.1} parent=39 // pred_region
          %v1084 = vld [vmem:[#allocation2] sm:$0xff]
          %v1085 = vld [vmem:[#allocation2 + $0x8] sm:$0xff]
          %v1086 = vld [vmem:[#allocation2 + $0x10] sm:$0xff]
          %v1087 = vld [vmem:[#allocation2 + $0x18] sm:$0xff]
          %v1088 = vld [vmem:[#allocation2 + $0x20] sm:$0xff]
          %v1089 = vld [vmem:[#allocation2 + $0x28] sm:$0xff]
          %v1090 = vld [vmem:[#allocation2 + $0x30] sm:$0xff]
          %v1091 = vld [vmem:[#allocation2 + $0x38] sm:$0xff]
          %v1092 = vld [vmem:[#allocation2 + $0x40] sm:$0xff]
          %v1093 = vld [vmem:[#allocation2 + $0x48] sm:$0xff]
          %v1094 = vld [vmem:[#allocation2 + $0x50] sm:$0xff]
          %v1095 = vld [vmem:[#allocation2 + $0x58] sm:$0xff]
          %v1096 = vld [vmem:[#allocation2 + $0x60] sm:$0xff]
          %v1097 = vld [vmem:[#allocation2 + $0x68] sm:$0xff]
          %v1098 = vld [vmem:[#allocation2 + $0x70] sm:$0xff]
          %v1099 = vld [vmem:[#allocation2 + $0x78] sm:$0xff]
          %1100 = vst [vmem:[%s366] sm:$0xff] %v1084
          %1101 = vst [vmem:[%s366 + $0x8] sm:$0xff] %v1085
          %1102 = vst [vmem:[%s366 + $0x10] sm:$0xff] %v1086
          %1103 = vst [vmem:[%s366 + $0x18] sm:$0xff] %v1087
          %1104 = vst [vmem:[%s366 + $0x20] sm:$0xff] %v1088
          %1105 = vst [vmem:[%s366 + $0x28] sm:$0xff] %v1089
          %1106 = vst [vmem:[%s366 + $0x30] sm:$0xff] %v1090
          %1107 = vst [vmem:[%s366 + $0x38] sm:$0xff] %v1091
          %1108 = vst [vmem:[%s366 + $0x40] sm:$0xff] %v1092
          %1109 = vst [vmem:[%s366 + $0x48] sm:$0xff] %v1093
          %1110 = vst [vmem:[%s366 + $0x50] sm:$0xff] %v1094
          %1111 = vst [vmem:[%s366 + $0x58] sm:$0xff] %v1095
          %1112 = vst [vmem:[%s366 + $0x60] sm:$0xff] %v1096
          %1113 = vst [vmem:[%s366 + $0x68] sm:$0xff] %v1097
          %1114 = vst [vmem:[%s366 + $0x70] sm:$0xff] %v1098
          %1115 = vst [vmem:[%s366 + $0x78] sm:$0xff] %v1099
        $region64: #{tpu_custom_call.1} parent=39 // pred_fallthru
          _
        %s1116 = sand.u32 %s173, 1
        %s1117 = scalar_lea.sflag [#allocation5], %s1116
        %s1118 = sand.u32 %s173, 1
        %s1119 = smul.addr %s1118, 128
        %s1120 = scalar_lea.vmem [#allocation11], %s1119
        // Predicated region
        $region65: #{tpu_custom_call.1} parent=39 // pred_check
          %p1121 = pneg %p183
        $region66: #{tpu_custom_call.1} parent=39 // pred_check_branch
          %1123 = sbr.rel (%p1121) target = $region68
        $region67: #{tpu_custom_call.1} parent=39 // pred_region
          %s1124 = smul.u32 8, %s32
          %s1126 = ssub.s32 2048, 2048
          %1127 = vsyncadd %s1117, %s1126
          %s1128 = smul.addr %s1124, 2
          %s1129 = smul.addr %s1128, 128
          %s1130 = scalar_lea.hbm %s5, %s1129
          %s1131 = sshll.u32 %s1120, 4
          %s1132 = int_to_ptr.vmem [resolvable:$true] %s1131
          %1137 = dma.vmem_to_hbm [thread:$0]  %s1132, 2048, %s1130, %s1117, 256, 256, 16
        $region68: #{tpu_custom_call.1} parent=39 // pred_fallthru
          _
      $region40: #{tpu_custom_call.1} parent=5 // pred_fallthru
        _
      %p1138 = scmp.le.s32.totalorder 2, %s23
      // Predicated region
      $region69: #{tpu_custom_call.1} parent=5 // pred_check
        %p1139 = pneg %p1138
      $region70: #{tpu_custom_call.1} parent=5 // pred_check_branch
        %1141 = sbr.rel (%p1139) target = $region72
      $region71: #{tpu_custom_call.1} parent=5 // pred_region
        %s1142 = ssub.s32 %s23, 2
        // Predicated region
        $region73: #{tpu_custom_call.1} parent=71 // pred_check
          %p1143 = pneg %p189
        $region74: #{tpu_custom_call.1} parent=71 // pred_check_branch
          %1145 = sbr.rel (%p1143) target = $region76
        $region75: #{tpu_custom_call.1} parent=71 // pred_region
          %s1146 = sand.u32 %s174, 1
          %s1147 = scalar_lea.sflag [#allocation5], %s1146
          %s1148 = sand.u32 %s174, 1
          %s1149 = smul.addr %s1148, 128
          %s1150 = scalar_lea.vmem [#allocation11], %s1149
          %1151 = dma.done %s1147, 2048
        $region76: #{tpu_custom_call.1} parent=71 // pred_fallthru
          _
      $region72: #{tpu_custom_call.1} parent=5 // pred_fallthru
        _
    $region6: #{tpu_custom_call.1} parent=1 // loop_footer
      %s27 = sadd.s32 1, %s23
    $region7: #{tpu_custom_call.1} parent=1 // loop_footer_branch
      %22 = sbr.rel target = $region3
    $region8: #{tpu_custom_call.1} parent=1 // loop_exit
      _
    %1152 = vsyncpa [#allocation4], 1
    %s1153 = scalar_lea.sflag [#allocation4], 1
    %1154 = vsyncpa %s1153, 1
    %1155 = vsyncpa [#allocation7], 1
    %s1156 = scalar_lea.sflag [#allocation7], 1
    %1157 = vsyncpa %s1156, 1
    %1158 = vsyncpa [#allocation10], 1
    %s1159 = scalar_lea.sflag [#allocation10], 1
    %1160 = vsyncpa %s1159, 1
    %1161 = vsyncpa [#allocation5], 1
    %s1162 = scalar_lea.sflag [#allocation5], 1
    %1163 = vsyncpa %s1162, 1

</llo_original>
